<compile_context>
chip_gen: v7x
topology: tpu7x:2x2x1
jax: 0.10.0
libtpu: 0.0.40
codegen_flags: <defaults>
</compile_context>

<pallas_src>
import functools

import jax
import jax.numpy as jnp
from jax.experimental import pallas as pl
from jax.experimental.pallas import tpu as pltpu

_LANE = 128
_SUBLANE = 8


def _relu_kernel(x_ref, o_ref):
    # Plain-ReLU branch: single input stream, no K, no select.
    o_ref[...] = jnp.maximum(x_ref[...], 0.0)


def _relu_scale_bias_kernel(x_ref, k_ref, o_ref, *, bias):
    # Linear branch: relu(x) * K + bias, bias is a trace-time constant.
    y = jnp.maximum(x_ref[...], 0.0) * k_ref[...]
    if bias != 0.0:
        y = y + bias
    o_ref[...] = y


def _as_slab(a, cols, rows_padded):
    """Flatten `a`, zero-pad to rows_padded*cols and reshape lane-dense."""
    flat = a.reshape(-1)
    pad = rows_padded * cols - flat.size
    if pad:
        flat = jnp.pad(flat, (0, pad))
    return flat.reshape(rows_padded, cols)


def stochastic_relu(x, K=None, *, use_linear=False, bias=0.0,
                    block_rows=512, lane_cols=1024,
                    vmem_limit_bytes=32 * 1024 * 1024):
    """Pallas forward of stochasticReLU.

    x: float32 array (module uses a 2-D tensor).
    K: per-element U(low, high) scales, same shape as x; only read when
       use_linear is True.
    use_linear / bias: static Python values for this call (coin flip / w).
    """
    orig_shape = x.shape
    n = x.size

    # Lane-dense slab layout.
    cols = lane_cols if n >= lane_cols * _SUBLANE else _LANE
    rows = pl.cdiv(n, cols)
    rows = pl.cdiv(rows, _SUBLANE) * _SUBLANE            # sublane-align
    tr = min(block_rows, rows)                           # rows per block (x8)
    rows_padded = pl.cdiv(rows, tr) * tr
    grid = (rows_padded // tr,)

    x_slab = _as_slab(x, cols, rows_padded)
    blk = pl.BlockSpec((tr, cols), lambda i: (i, 0))
    cparams = pltpu.CompilerParams(
        dimension_semantics=("parallel",),
        vmem_limit_bytes=vmem_limit_bytes)
    out_shape = jax.ShapeDtypeStruct((rows_padded, cols), x.dtype)

    if use_linear:
        if K is None:
            raise ValueError("K must be provided when use_linear=True")
        k_slab = _as_slab(K.astype(x.dtype), cols, rows_padded)
        out_slab = pl.pallas_call(
            functools.partial(_relu_scale_bias_kernel, bias=float(bias)),
            out_shape=out_shape,
            grid=grid,
            in_specs=[blk, blk],
            out_specs=blk,
            compiler_params=cparams,
        )(x_slab, k_slab)
    else:
        # ReLU-only branch: K never leaves HBM.
        out_slab = pl.pallas_call(
            _relu_kernel,
            out_shape=out_shape,
            grid=grid,
            in_specs=[blk],
            out_specs=blk,
            compiler_params=cparams,
        )(x_slab)

    return out_slab.reshape(-1)[:n].reshape(orig_shape)


if __name__ == "__main__":
    # Module hyper-parameters (from __init__(low, high))
    low, high = 0.5, 1.5

    # Deterministic randomness
    key = jax.random.PRNGKey(0)
    kx, kcoin, kK, kw = jax.random.split(key, 4)

    dim0, dim1 = 16, 100                      # 2-D input, as in forward()
    x = jax.random.normal(kx, (dim0, dim1), dtype=jnp.float32)

    # coin = random.randint(1, 4); coin < 3 -> plain ReLU branch
    coin = int(jax.random.randint(kcoin, (), 1, 5))
    use_linear = coin >= 3

    # K = [uniform(low, high) for _ in range(dim0 * dim1)]
    K = jax.random.uniform(kK, (dim0, dim1), minval=low, maxval=high,
                           dtype=jnp.float32)

    # w = random.randint(-5, 5); bias = w/10 unless w == 0
    w = int(jax.random.randint(kw, (), -5, 6))
    bias = 0.0 if w == 0 else w / 10.0

    relu_x = jnp.maximum(x, 0.0)

    # Branch the module would take on this call.
    out = stochastic_relu(x, K, use_linear=use_linear, bias=bias)
    out = jax.block_until_ready(out)
    ref = (relu_x * K + bias) if use_linear else relu_x
    assert jnp.allclose(out, ref, atol=1e-6), "mismatch vs reference (coin branch)"

    # Exercise the other branch too so both kernel variants are validated.
    out_other = stochastic_relu(x, K, use_linear=not use_linear, bias=bias)
    out_other = jax.block_until_ready(out_other)
    ref_other = relu_x if use_linear else (relu_x * K + bias)
    assert jnp.allclose(out_other, ref_other, atol=1e-6), \
        "mismatch vs reference (other branch)"

    print("KERNEL_OK")
</pallas_src>

<mosaic_0001>
module attributes {stable_mosaic.version = 11 : i64} {
  func.func @_relu_scale_bias_kernel(%arg0: i32, %arg1: memref<16x128xf32, #tpu.memory_space<vmem>>, %arg2: memref<16x128xf32, #tpu.memory_space<vmem>>, %arg3: memref<16x128xf32, #tpu.memory_space<vmem>>) attributes {dimension_semantics = [#tpu.dimension_semantics<parallel>], iteration_bounds = array<i64: 1>, scalar_prefetch = 0 : i64, scratch_operands = 0 : i64, tpu.core_type = #tpu.core_type<tc>, window_params = [{transform_indices = @transform_0, window_bounds = array<i64: 16, 128>}, {transform_indices = @transform_1, window_bounds = array<i64: 16, 128>}, {transform_indices = @transform_2, window_bounds = array<i64: 16, 128>}]} {
    %c0 = arith.constant 0 : index
    %c0_0 = arith.constant 0 : index
    %0 = vector.load %arg1[%c0, %c0_0] : memref<16x128xf32, #tpu.memory_space<vmem>>, vector<16x128xf32>
    %cst = arith.constant 0.000000e+00 : f32
    %1 = vector.broadcast %cst : f32 to vector<16x128xf32>
    %2 = arith.maximumf %0, %1 : vector<16x128xf32>
    %c0_1 = arith.constant 0 : index
    %c0_2 = arith.constant 0 : index
    %3 = vector.load %arg2[%c0_1, %c0_2] : memref<16x128xf32, #tpu.memory_space<vmem>>, vector<16x128xf32>
    %4 = arith.mulf %2, %3 : vector<16x128xf32>
    %cst_3 = arith.constant 1.000000e-01 : f32
    %5 = vector.broadcast %cst_3 : f32 to vector<16x128xf32>
    %6 = arith.addf %4, %5 : vector<16x128xf32>
    %c0_4 = arith.constant 0 : index
    %c0_5 = arith.constant 0 : index
    %7 = vector.load %arg3[%c0_4, %c0_5] : memref<16x128xf32, #tpu.memory_space<vmem>>, vector<16x128xf32>
    tpu.vector_store %arg3[%c0_4, %c0_5], %6 {strides = array<i32>} : memref<16x128xf32, #tpu.memory_space<vmem>>, vector<16x128xf32>,
    return
  }
  func.func @transform_0(%arg0: i32) -> (i32, i32) {
    %c0_i32 = arith.constant 0 : i32
    %c0_i32_0 = arith.constant 0 : i32
    return %arg0, %c0_i32 : i32, i32
  }
  func.func @transform_1(%arg0: i32) -> (i32, i32) {
    %c0_i32 = arith.constant 0 : i32
    %c0_i32_0 = arith.constant 0 : i32
    return %arg0, %c0_i32 : i32, i32
  }
  func.func @transform_2(%arg0: i32) -> (i32, i32) {
    %c0_i32 = arith.constant 0 : i32
    %c0_i32_0 = arith.constant 0 : i32
    return %arg0, %c0_i32 : i32, i32
  }
}

</mosaic_0001>

<llo_original>
// kernel: tpu_custom_call.1
$region0: #{tpu_custom_call.1}
  #allocation0 [shape = 'u32[]', space=smem, size = 0x4, offset = 0x4, fixed_abs, tag = 'smem constant byte address 0x4 - core index']
  #allocation1 [shape = 'u32[144,128]{1,0:T(1,128)}', space=vmem, size = 0x12000, scoped, tag = 'internal scratch']
  %s0 = inlined_call_operand.hbm [shape: f32[16,128], index: 0, kind: input, shape index: {}]
  %s1 = inlined_call_operand.hbm [shape: f32[16,128], index: 1, kind: input, shape index: {}]
  %s2 = inlined_call_operand.hbm [shape: f32[16,128], index: 2, kind: output, shape index: {}]
  %s3 = sld [smem:[#allocation0]]
  $region26: #{tpu_custom_call.1} parent=0
    _
  %s5 = ssub.s32 1, %s3
  %s6 = scalar_select 0, %s5, %s3
  $region1: #{tpu_custom_call.1} parent=0
    #allocation2 [shape = 'u8[8192]{0}', space=vmem, size = 0x2000, scoped, tag = 'input window, operand 0, single buffered']
    #allocation3 [shape = 's32[1]{0}', space=sflag, size = 0x4, scoped, tag = 'scoped memory for tpu_custom_call.1']
    #allocation4 [shape = 's32[1]{0}', space=sflag, size = 0x4, scoped, tag = 'scoped memory for tpu_custom_call.1']
    #allocation5 [shape = 'u8[8192]{0}', space=vmem, size = 0x2000, scoped, tag = 'input window, operand 1, single buffered']
    #allocation6 [shape = 's32[1]{0}', space=sflag, size = 0x4, scoped, tag = 'scoped memory for tpu_custom_call.1']
    #allocation7 [shape = 'u8[8192]{0}', space=vmem, size = 0x2000, scoped, tag = 'output window, operand 0, single buffered']
    %7 = vsyncpa [#allocation3], 0
    %8 = vsyncpa [#allocation6], 0
    %9 = vsyncpa [#allocation4], 0
    // Predicated region
    $region2: #{tpu_custom_call.1} parent=1 // pred_check
      _
    $region3: #{tpu_custom_call.1} parent=1 // pred_check_branch
      %11 = sbr.rel (0) target = $region5
    $region4: #{tpu_custom_call.1} parent=1 // pred_region
      %s13 = ssub.s32 256, 256
      %14 = vsyncadd [#allocation3], %s13
      %s15 = sshll.u32 [#allocation2], 4
      %s16 = int_to_ptr.vmem [resolvable:$true] %s15
      %21 = dma.hbm_to_vmem [thread:$0]  %s0, 256, %s16, [#allocation3], 128, 128, 8
    $region5: #{tpu_custom_call.1} parent=1 // pred_fallthru
      _
    // Predicated region
    $region6: #{tpu_custom_call.1} parent=1 // pred_check
      _
    $region7: #{tpu_custom_call.1} parent=1 // pred_check_branch
      %23 = sbr.rel (0) target = $region9
    $region8: #{tpu_custom_call.1} parent=1 // pred_region
      %s25 = ssub.s32 256, 256
      %26 = vsyncadd [#allocation6], %s25
      %s27 = sshll.u32 [#allocation5], 4
      %s28 = int_to_ptr.vmem [resolvable:$true] %s27
      %33 = dma.hbm_to_vmem [thread:$0]  %s1, 256, %s28, [#allocation6], 128, 128, 8
    $region9: #{tpu_custom_call.1} parent=1 // pred_fallthru
      _
    // Predicated region
    $region10: #{tpu_custom_call.1} parent=1 // pred_check
      _
    $region11: #{tpu_custom_call.1} parent=1 // pred_check_branch
      %35 = sbr.rel (0) target = $region13
    $region12: #{tpu_custom_call.1} parent=1 // pred_region
      %36 = dma.done [#allocation3], 256
    $region13: #{tpu_custom_call.1} parent=1 // pred_fallthru
      _
    // Predicated region
    $region14: #{tpu_custom_call.1} parent=1 // pred_check
      _
    $region15: #{tpu_custom_call.1} parent=1 // pred_check_branch
      %38 = sbr.rel (0) target = $region17
    $region16: #{tpu_custom_call.1} parent=1 // pred_region
      %39 = dma.done [#allocation6], 256
    $region17: #{tpu_custom_call.1} parent=1 // pred_fallthru
      _
    %v40 = vld [vmem:[#allocation2] sm:$0xff]
    %v41 = vld [vmem:[#allocation2 + $0x8] sm:$0xff]
    %v42 = vmax.f32 %v40, 0.0
    %v43 = vmax.f32 %v41, 0.0
    %v44 = vld [vmem:[#allocation5] sm:$0xff]
    %v45 = vld [vmem:[#allocation5 + $0x8] sm:$0xff]
    %v46 = vmul.f32 %v42, %v44
    %v47 = vmul.f32 %v43, %v45
    %v48 = vadd.f32 %v46, 0.1
    %v49 = vadd.f32 %v47, 0.1
    %50 = vst [vmem:[#allocation7] sm:$0xff] %v48
    %51 = vst [vmem:[#allocation7 + $0x8] sm:$0xff] %v49
    // Predicated region
    $region18: #{tpu_custom_call.1} parent=1 // pred_check
      _
    $region19: #{tpu_custom_call.1} parent=1 // pred_check_branch
      %53 = sbr.rel (0) target = $region21
    $region20: #{tpu_custom_call.1} parent=1 // pred_region
      %s55 = ssub.s32 256, 256
      %56 = vsyncadd [#allocation4], %s55
      %s57 = sshll.u32 [#allocation7], 4
      %s58 = int_to_ptr.vmem [resolvable:$true] %s57
      %63 = dma.vmem_to_hbm [thread:$0]  %s58, 256, %s2, [#allocation4], 128, 128, 8
    $region21: #{tpu_custom_call.1} parent=1 // pred_fallthru
      _
    // Predicated region
    $region22: #{tpu_custom_call.1} parent=1 // pred_check
      _
    $region23: #{tpu_custom_call.1} parent=1 // pred_check_branch
      %65 = sbr.rel (0) target = $region25
    $region24: #{tpu_custom_call.1} parent=1 // pred_region
      %66 = dma.done [#allocation4], 256
    $region25: #{tpu_custom_call.1} parent=1 // pred_fallthru
      _
    %67 = vsyncpa [#allocation3], 1
    %68 = vsyncpa [#allocation6], 1
    %69 = vsyncpa [#allocation4], 1

</llo_original>
